<compile_context>
chip_gen: v7x
topology: tpu7x:2x2x1
jax: 0.10.0
libtpu: 0.0.40
codegen_flags: <defaults>
</compile_context>

<pallas_src>
import functools

import jax
import jax.numpy as jnp
from jax.experimental import pallas as pl
from jax.experimental.pallas import tpu as pltpu

LANE = 128      # lane width (last dim)
SUBLANE = 8     # sublane width (second-to-last dim)
_VMEM_LIMIT = 32 * 1024 * 1024


# ---------------------------------------------------------------------------
# small helpers
# ---------------------------------------------------------------------------
def _round_up(n, m):
    return ((n + m - 1) // m) * m


def _pad2(a, rows, cols):
    r, c = a.shape
    return jnp.pad(a, ((0, rows - r), (0, cols - c)))


def _masked_log_softmax(z, num_classes):
    """Row-wise log_softmax (f32) over the first `num_classes` lanes of z."""
    lane = jax.lax.broadcasted_iota(jnp.int32, z.shape, dimension=1)
    z = jnp.where(lane < num_classes, z, -1e30)
    m = jnp.max(z, axis=-1, keepdims=True)
    s = z - m
    lse = jnp.log(jnp.sum(jnp.exp(s), axis=-1, keepdims=True))
    return s - lse


# ---------------------------------------------------------------------------
# Pallas kernels
# ---------------------------------------------------------------------------
def _make_fused_net_kernel(num_layers, num_classes):
    """Whole network (all layers + log_softmax) in a single kernel, VMEM-resident."""

    def kernel(*refs):
        a_ref, x_ref = refs[0], refs[1]
        o_ref = refs[-1]
        wb_refs = refs[2:-1]

        a = a_ref[...]                       # (N, N)  bf16
        h = x_ref[...]                       # (N, F0) bf16
        for i in range(num_layers):
            w = wb_refs[2 * i][...]          # (Fi, Fo) bf16
            b = wb_refs[2 * i + 1][...]      # (1, Fo)  f32
            xw = jnp.dot(h, w, preferred_element_type=jnp.float32)
            z = jnp.dot(a, xw.astype(jnp.bfloat16),
                        preferred_element_type=jnp.float32) + b
            if i < num_layers - 1:
                h = jnp.maximum(z, 0.0).astype(jnp.bfloat16)
            else:
                o_ref[...] = _masked_log_softmax(z, num_classes).astype(o_ref.dtype)

    return kernel


def _xw_kernel(x_ref, w_ref, o_ref):
    # feature transform X @ W, computed exactly once per layer (not per A-tile)
    o_ref[...] = jnp.dot(x_ref[...], w_ref[...],
                         preferred_element_type=jnp.float32).astype(o_ref.dtype)


def _agg_kernel(a_ref, xw_ref, b_ref, o_ref, acc_ref, *, activation, num_classes):
    # out[i] = activation( sum_k A[i,k] @ XW[k] + b )
    k = pl.program_id(1)

    @pl.when(k == 0)
    def _():
        # fold the bias into the accumulator init (no per-step bias add)
        acc_ref[...] = jnp.broadcast_to(b_ref[...], acc_ref.shape)

    acc_ref[...] += jnp.dot(a_ref[...], xw_ref[...],
                            preferred_element_type=jnp.float32)

    @pl.when(k == pl.num_programs(1) - 1)
    def _():
        z = acc_ref[...]
        if activation == "relu":
            z = jnp.maximum(z, 0.0)
        elif activation == "log_softmax":
            z = _masked_log_softmax(z, num_classes)
        o_ref[...] = z.astype(o_ref.dtype)


# ---------------------------------------------------------------------------
# pallas_call wrappers
# ---------------------------------------------------------------------------
def _xw_pallas(x, w, tm):
    n_pad, f_pad = x.shape
    h_pad = w.shape[1]
    return pl.pallas_call(
        _xw_kernel,
        out_shape=jax.ShapeDtypeStruct((n_pad, h_pad), jnp.bfloat16),
        grid=(n_pad // tm,),
        in_specs=[pl.BlockSpec((tm, f_pad), lambda i: (i, 0)),
                  pl.BlockSpec((f_pad, h_pad), lambda i: (0, 0))],
        out_specs=pl.BlockSpec((tm, h_pad), lambda i: (i, 0)),
        compiler_params=pltpu.CompilerParams(
            dimension_semantics=("parallel",),
            vmem_limit_bytes=_VMEM_LIMIT),
    )(x, w)


def _agg_pallas(a, xw, b, tm, tk, *, activation, num_classes, out_dtype):
    n_pad = a.shape[0]
    h_pad = xw.shape[1]
    kernel = functools.partial(_agg_kernel, activation=activation,
                               num_classes=num_classes)
    # TODO(synk): block-sparse A_hat aggregation via PrefetchScalarGridSpec
    # (scalar-prefetched block offsets) for very large, sparse graphs.
    return pl.pallas_call(
        kernel,
        out_shape=jax.ShapeDtypeStruct((n_pad, h_pad), out_dtype),
        grid=(n_pad // tm, n_pad // tk),
        in_specs=[pl.BlockSpec((tm, tk), lambda i, k: (i, k)),
                  pl.BlockSpec((tk, h_pad), lambda i, k: (k, 0)),
                  pl.BlockSpec((1, h_pad), lambda i, k: (0, 0))],
        out_specs=pl.BlockSpec((tm, h_pad), lambda i, k: (i, 0)),
        scratch_shapes=[pltpu.VMEM((tm, h_pad), jnp.float32)],
        compiler_params=pltpu.CompilerParams(
            dimension_semantics=("parallel", "arbitrary"),
            vmem_limit_bytes=_VMEM_LIMIT),
    )(a, xw, b)


# ---------------------------------------------------------------------------
# Glue: normalized adjacency + parameters
# ---------------------------------------------------------------------------
def build_normalized_adjacency(edge_index, num_nodes):
    """Dense A_hat = D^{-1/2} (A + I) D^{-1/2} (GCNConv default normalization)."""
    src, dst = edge_index[0], edge_index[1]
    a = jnp.zeros((num_nodes, num_nodes), jnp.float32)
    a = a.at[src, dst].set(1.0)
    # add self-loops only where missing (matches PyG add_remaining_self_loops)
    a = jnp.maximum(a, jnp.eye(num_nodes, dtype=jnp.float32))
    deg = jnp.sum(a, axis=1)
    d_inv_sqrt = jnp.where(deg > 0, 1.0 / jnp.sqrt(deg), 0.0)
    return d_inv_sqrt[:, None] * a * d_inv_sqrt[None, :]


def init_gcn_params(key, num_layers, num_features, hidden, num_classes):
    """Glorot-uniform weights + zero bias per layer (GCNConv.reset_parameters)."""
    dims = [num_features] + [hidden] * (num_layers - 1) + [num_classes]
    params = []
    for i in range(num_layers):
        key, sub = jax.random.split(key)
        f_in, f_out = dims[i], dims[i + 1]
        limit = jnp.sqrt(6.0 / (f_in + f_out))
        w = jax.random.uniform(sub, (f_in, f_out), jnp.float32, -limit, limit)
        b = jnp.zeros((1, f_out), jnp.float32)
        params.append((w, b))
    return params


def gcn_net_reference(x, edge_index, params):
    """Pure-JAX f32 reference of GCN_Net.forward (eval mode)."""
    a_hat = build_normalized_adjacency(edge_index, x.shape[0])
    h = x
    for i, (w, b) in enumerate(params):
        z = a_hat @ (h @ w) + b
        h = jnp.maximum(z, 0.0) if i < len(params) - 1 else z
    return jax.nn.log_softmax(h, axis=1)


# ---------------------------------------------------------------------------
# Forward passes
# ---------------------------------------------------------------------------
def gcn_net_forward_fused(x, edge_index, params):
    """Entire network in ONE pallas_call (small graphs: everything fits in VMEM)."""
    n, f = x.shape
    num_layers = len(params)
    num_classes = params[-1][0].shape[1]
    # Pad the node axis to a full lane so A_hat itself is lane-dense (its last
    # dim maps to lanes) -- padded rows/cols are zeros and are sliced off below.
    n_pad = _round_up(n, LANE)
    f_pad = _round_up(f, LANE)
    c_pad = _round_up(num_classes, LANE)

    a_hat = build_normalized_adjacency(edge_index, n)
    a_p = _pad2(a_hat, n_pad, n_pad).astype(jnp.bfloat16)
    x_p = _pad2(x, n_pad, f_pad).astype(jnp.bfloat16)

    inputs = [a_p, x_p]
    in_specs = [pl.BlockSpec(a_p.shape, lambda: (0, 0)),
                pl.BlockSpec(x_p.shape, lambda: (0, 0))]
    for (w, b) in params:
        fi, fo = w.shape
        w_p = _pad2(w, _round_up(fi, LANE), _round_up(fo, LANE)).astype(jnp.bfloat16)
        b_p = _pad2(jnp.reshape(b, (1, -1)), 1, _round_up(fo, LANE)).astype(jnp.float32)
        inputs += [w_p, b_p]
        in_specs += [pl.BlockSpec(w_p.shape, lambda: (0, 0)),
                     pl.BlockSpec(b_p.shape, lambda: (0, 0))]

    out = pl.pallas_call(
        _make_fused_net_kernel(num_layers, num_classes),
        out_shape=jax.ShapeDtypeStruct((n_pad, c_pad), jnp.float32),
        in_specs=in_specs,
        out_specs=pl.BlockSpec((n_pad, c_pad), lambda: (0, 0)),
        compiler_params=pltpu.CompilerParams(vmem_limit_bytes=_VMEM_LIMIT),
    )(*inputs)
    return out[:n, :num_classes]


def gcn_net_forward_tiled(x, edge_index, params, *, block=256):
    """Scalable path: per layer, X@W once + tiled A_hat aggregation with f32 accumulator."""
    n, f = x.shape
    num_classes = params[-1][0].shape[1]
    tm = tk = min(block, _round_up(n, SUBLANE))
    n_pad = _round_up(n, tm)

    a_hat = build_normalized_adjacency(edge_index, n)
    a_p = _pad2(a_hat, n_pad, n_pad).astype(jnp.bfloat16)
    h = _pad2(x, n_pad, _round_up(f, LANE)).astype(jnp.bfloat16)

    for i, (w, b) in enumerate(params):
        fi, fo = w.shape
        w_p = _pad2(w, _round_up(fi, LANE), _round_up(fo, LANE)).astype(jnp.bfloat16)
        b_p = _pad2(jnp.reshape(b, (1, -1)), 1, _round_up(fo, LANE)).astype(jnp.float32)
        last = i == len(params) - 1
        xw = _xw_pallas(h, w_p, tm)          # X @ W computed exactly once per layer
        h = _agg_pallas(a_p, xw, b_p, tm, tk,
                        activation="log_softmax" if last else "relu",
                        num_classes=num_classes,
                        out_dtype=jnp.float32 if last else jnp.bfloat16)
    return h[:n, :num_classes]


def gcn_net_forward(x, edge_index, params, *, mode="auto", block=256):
    """Forward pass of GCN_Net (eval mode: dropout = identity)."""
    if mode == "fused" or (mode == "auto" and x.shape[0] <= 1024):
        return gcn_net_forward_fused(x, edge_index, params)
    return gcn_net_forward_tiled(x, edge_index, params, block=block)


# ---------------------------------------------------------------------------
# main
# ---------------------------------------------------------------------------
def make_graph(key, num_nodes, num_extra):
    ring_src = jnp.arange(num_nodes, dtype=jnp.int32)
    ring_dst = (ring_src + 1) % num_nodes
    extra_src = jax.random.randint(key, (num_extra,), 0, num_nodes, dtype=jnp.int32)
    extra_dst = (extra_src + 3) % num_nodes
    src = jnp.concatenate([ring_src, extra_src])
    dst = jnp.concatenate([ring_dst, extra_dst])
    return jnp.stack([jnp.concatenate([src, dst]), jnp.concatenate([dst, src])], axis=0)


if __name__ == "__main__":
    # ---- small config (the module's typical tiny regime) -> fused single kernel
    num_layers, num_features, hidden, num_classes = 2, 8, 32, 4
    num_nodes = 16

    key = jax.random.PRNGKey(0)
    k_x, k_e, k_p, k_x2, k_e2, k_p2 = jax.random.split(key, 6)

    x = jax.random.normal(k_x, (num_nodes, num_features), jnp.float32)
    edge_index = make_graph(k_e, num_nodes, num_extra=8)
    params = init_gcn_params(k_p, num_layers, num_features, hidden, num_classes)

    pred = gcn_net_forward(x, edge_index, params)   # auto -> fully fused kernel
    jax.block_until_ready(pred)

    assert pred.shape == (num_nodes, num_classes)
    assert jnp.allclose(jnp.sum(jnp.exp(pred), axis=1), 1.0, atol=1e-3)
    ref = gcn_net_reference(x, edge_index, params)
    assert float(jnp.max(jnp.abs(pred - ref))) < 0.2, "fused path mismatch vs f32 reference"

    # ---- moderate config exercising the scalable tiled (parallel, arbitrary) path
    n2, f2, h2, c2, l2 = 384, 64, 128, 16, 3
    x2 = jax.random.normal(k_x2, (n2, f2), jnp.float32)
    e2 = make_graph(k_e2, n2, num_extra=512)
    params2 = init_gcn_params(k_p2, l2, f2, h2, c2)

    pred2 = gcn_net_forward(x2, e2, params2, mode="tiled", block=256)
    jax.block_until_ready(pred2)

    assert pred2.shape == (n2, c2)
    assert jnp.allclose(jnp.sum(jnp.exp(pred2), axis=1), 1.0, atol=1e-3)
    ref2 = gcn_net_reference(x2, e2, params2)
    assert float(jnp.max(jnp.abs(pred2 - ref2))) < 0.3, "tiled path mismatch vs f32 reference"

    print("KERNEL_OK")
</pallas_src>

<mosaic_0001>
module attributes {stable_mosaic.version = 11 : i64} {
  func.func @kernel(%arg0: memref<128x128xbf16, #tpu.memory_space<vmem>>, %arg1: memref<128x128xbf16, #tpu.memory_space<vmem>>, %arg2: memref<128x128xbf16, #tpu.memory_space<vmem>>, %arg3: memref<1x128xf32, #tpu.memory_space<vmem>>, %arg4: memref<128x128xbf16, #tpu.memory_space<vmem>>, %arg5: memref<1x128xf32, #tpu.memory_space<vmem>>, %arg6: memref<128x128xf32, #tpu.memory_space<vmem>>) attributes {dimension_semantics = [], scalar_prefetch = 0 : i64, scratch_operands = 0 : i64, tpu.core_type = #tpu.core_type<tc>} {
    %c0 = arith.constant 0 : index
    %c0_0 = arith.constant 0 : index
    %0 = vector.load %arg0[%c0, %c0_0] : memref<128x128xbf16, #tpu.memory_space<vmem>>, vector<128x128xbf16>
    %c0_1 = arith.constant 0 : index
    %c0_2 = arith.constant 0 : index
    %1 = vector.load %arg1[%c0_1, %c0_2] : memref<128x128xbf16, #tpu.memory_space<vmem>>, vector<128x128xbf16>
    %c0_3 = arith.constant 0 : index
    %c0_4 = arith.constant 0 : index
    %2 = vector.load %arg2[%c0_3, %c0_4] : memref<128x128xbf16, #tpu.memory_space<vmem>>, vector<128x128xbf16>
    %c0_5 = arith.constant 0 : index
    %c0_6 = arith.constant 0 : index
    %3 = vector.load %arg3[%c0_5, %c0_6] : memref<1x128xf32, #tpu.memory_space<vmem>>, vector<1x128xf32>
    %cst = arith.constant dense<0.000000e+00> : vector<128x128xf32>
    %4 = tpu.matmul %1, %2, %cst {dimension_numbers = #tpu.dot_dimension_numbers<[1], [0], [0], [1], [0, 0, 1, 1], [], []>} : vector<128x128xbf16>, vector<128x128xbf16>, vector<128x128xf32> -> vector<128x128xf32>
    %5 = arith.truncf %4 : vector<128x128xf32> to vector<128x128xbf16>
    %cst_7 = arith.constant dense<0.000000e+00> : vector<128x128xf32>
    %6 = tpu.matmul %0, %5, %cst_7 {dimension_numbers = #tpu.dot_dimension_numbers<[1], [0], [0], [1], [0, 0, 1, 1], [], []>} : vector<128x128xbf16>, vector<128x128xbf16>, vector<128x128xf32> -> vector<128x128xf32>
    %7 = vector.broadcast %3 : vector<1x128xf32> to vector<128x128xf32>
    %8 = arith.addf %6, %7 : vector<128x128xf32>
    %cst_8 = arith.constant 0.000000e+00 : f32
    %9 = vector.broadcast %cst_8 : f32 to vector<128x128xf32>
    %10 = arith.maximumf %8, %9 : vector<128x128xf32>
    %11 = arith.truncf %10 : vector<128x128xf32> to vector<128x128xbf16>
    %c0_9 = arith.constant 0 : index
    %c0_10 = arith.constant 0 : index
    %12 = vector.load %arg4[%c0_9, %c0_10] : memref<128x128xbf16, #tpu.memory_space<vmem>>, vector<128x128xbf16>
    %c0_11 = arith.constant 0 : index
    %c0_12 = arith.constant 0 : index
    %13 = vector.load %arg5[%c0_11, %c0_12] : memref<1x128xf32, #tpu.memory_space<vmem>>, vector<1x128xf32>
    %cst_13 = arith.constant dense<0.000000e+00> : vector<128x128xf32>
    %14 = tpu.matmul %11, %12, %cst_13 {dimension_numbers = #tpu.dot_dimension_numbers<[1], [0], [0], [1], [0, 0, 1, 1], [], []>} : vector<128x128xbf16>, vector<128x128xbf16>, vector<128x128xf32> -> vector<128x128xf32>
    %15 = arith.truncf %14 : vector<128x128xf32> to vector<128x128xbf16>
    %cst_14 = arith.constant dense<0.000000e+00> : vector<128x128xf32>
    %16 = tpu.matmul %0, %15, %cst_14 {dimension_numbers = #tpu.dot_dimension_numbers<[1], [0], [0], [1], [0, 0, 1, 1], [], []>} : vector<128x128xbf16>, vector<128x128xbf16>, vector<128x128xf32> -> vector<128x128xf32>
    %17 = vector.broadcast %13 : vector<1x128xf32> to vector<128x128xf32>
    %18 = arith.addf %16, %17 : vector<128x128xf32>
    %19 = tpu.iota {dimensions = array<i32: 1>} : vector<128x128xi32>
    %c4_i32 = arith.constant 4 : i32
    %20 = vector.broadcast %c4_i32 : i32 to vector<128x128xi32>
    %21 = arith.cmpi slt, %19, %20 : vector<128x128xi32>
    %cst_15 = arith.constant -1.000000e+30 : f32
    %22 = vector.broadcast %cst_15 : f32 to vector<128x128xf32>
    %23 = arith.select %21, %18, %22 : vector<128x128xi1>, vector<128x128xf32>
    %cst_16 = arith.constant dense<0xFF800000> : vector<128xf32>
    %24 = vector.multi_reduction <maximumf>, %23, %cst_16 [1] : vector<128x128xf32> to vector<128xf32>
    %25 = vector.shape_cast %24 : vector<128xf32> to vector<128x1xf32>
    %26 = vector.broadcast %25 : vector<128x1xf32> to vector<128x128xf32>
    %27 = arith.subf %23, %26 : vector<128x128xf32>
    %28 = math.exp %27 : vector<128x128xf32>
    %cst_17 = arith.constant dense<0.000000e+00> : vector<128xf32>
    %29 = vector.multi_reduction <add>, %28, %cst_17 [1] : vector<128x128xf32> to vector<128xf32>
    %30 = vector.shape_cast %29 : vector<128xf32> to vector<128x1xf32>
    %31 = math.log %30 : vector<128x1xf32>
    %32 = vector.broadcast %31 : vector<128x1xf32> to vector<128x128xf32>
    %33 = arith.subf %27, %32 : vector<128x128xf32>
    %c0_18 = arith.constant 0 : index
    %c0_19 = arith.constant 0 : index
    %34 = vector.load %arg6[%c0_18, %c0_19] : memref<128x128xf32, #tpu.memory_space<vmem>>, vector<128x128xf32>
    tpu.vector_store %arg6[%c0_18, %c0_19], %33 {strides = array<i32>} : memref<128x128xf32, #tpu.memory_space<vmem>>, vector<128x128xf32>,
    return
  }
}

</mosaic_0001>

<llo_original>
// kernel: tpu_custom_call.1
$region0: #{tpu_custom_call.1}
  #allocation0 [shape = 'u32[]', space=smem, size = 0x4, offset = 0x4, fixed_abs, tag = 'smem constant byte address 0x4 - core index']
  #allocation1 [shape = 'u32[144,128]{1,0:T(1,128)}', space=vmem, size = 0x12000, scoped, tag = 'internal scratch']
  %s0 = inlined_call_operand.hbm [shape: bf16[128,128], index: 0, kind: input, shape index: {}]
  %s1 = inlined_call_operand.hbm [shape: bf16[128,128], index: 1, kind: input, shape index: {}]
  %s2 = inlined_call_operand.hbm [shape: bf16[128,128], index: 2, kind: input, shape index: {}]
  %s3 = inlined_call_operand.vmem [shape: f32[1,128], index: 3, kind: input, shape index: {}]
  %s4 = inlined_call_operand.hbm [shape: bf16[128,128], index: 4, kind: input, shape index: {}]
  %s5 = inlined_call_operand.vmem [shape: f32[1,128], index: 5, kind: input, shape index: {}]
  %s6 = inlined_call_operand.hbm [shape: f32[128,128], index: 6, kind: output, shape index: {}]
  %s7 = sld [smem:[#allocation0]]
  $region50: #{tpu_custom_call.1} parent=0
    _
  %s9 = ssub.s32 1, %s7
  %s10 = scalar_select 0, %s9, %s7
  $region1: #{tpu_custom_call.1} parent=0
    #allocation2 [shape = 'u8[32768]{0}', space=vmem, size = 0x8000, scoped, tag = 'input window, operand 0, single buffered']
    #allocation3 [shape = 's32[1]{0}', space=sflag, size = 0x4, scoped, tag = 'scoped memory for tpu_custom_call.1']
    #allocation4 [shape = 's32[1]{0}', space=sflag, size = 0x4, scoped, tag = 'scoped memory for tpu_custom_call.1']
    #allocation5 [shape = 'u8[32768]{0}', space=vmem, size = 0x8000, scoped, tag = 'input window, operand 1, single buffered']
    #allocation6 [shape = 's32[1]{0}', space=sflag, size = 0x4, scoped, tag = 'scoped memory for tpu_custom_call.1']
    #allocation7 [shape = 'u8[32768]{0}', space=vmem, size = 0x8000, scoped, tag = 'input window, operand 2, single buffered']
    #allocation8 [shape = 'u8[32768]{0}', space=vmem, size = 0x8000, scoped, tag = 'input window, operand 4, single buffered']
    #allocation9 [shape = 's32[1]{0}', space=sflag, size = 0x4, scoped, tag = 'scoped memory for tpu_custom_call.1']
    #allocation10 [shape = 'u8[65536]{0}', space=vmem, size = 0x10000, scoped, tag = 'output window, operand 0, single buffered']
    %11 = vsyncpa [#allocation3], 0
    %12 = vsyncpa [#allocation6], 0
    %13 = vsyncpa [#allocation9], 0
    %14 = vsyncpa [#allocation4], 0
    // Predicated region
    $region2: #{tpu_custom_call.1} parent=1 // pred_check
      _
    $region3: #{tpu_custom_call.1} parent=1 // pred_check_branch
      %16 = sbr.rel (0) target = $region5
    $region4: #{tpu_custom_call.1} parent=1 // pred_region
      %s18 = ssub.s32 1024, 1024
      %19 = vsyncadd [#allocation3], %s18
      %s20 = sshll.u32 [#allocation2], 4
      %s21 = int_to_ptr.vmem [resolvable:$true] %s20
      %26 = dma.hbm_to_vmem [thread:$0]  %s0, 1024, %s21, [#allocation3], 64, 64, 4
    $region5: #{tpu_custom_call.1} parent=1 // pred_fallthru
      _
    // Predicated region
    $region6: #{tpu_custom_call.1} parent=1 // pred_check
      _
    $region7: #{tpu_custom_call.1} parent=1 // pred_check_branch
      %28 = sbr.rel (0) target = $region9
    $region8: #{tpu_custom_call.1} parent=1 // pred_region
      %s30 = ssub.s32 1024, 1024
      %31 = vsyncadd [#allocation6], %s30
      %s32 = sshll.u32 [#allocation5], 4
      %s33 = int_to_ptr.vmem [resolvable:$true] %s32
      %38 = dma.hbm_to_vmem [thread:$0]  %s1, 1024, %s33, [#allocation6], 64, 64, 4
    $region9: #{tpu_custom_call.1} parent=1 // pred_fallthru
      _
    // Predicated region
    $region10: #{tpu_custom_call.1} parent=1 // pred_check
      _
    $region11: #{tpu_custom_call.1} parent=1 // pred_check_branch
      %40 = sbr.rel (0) target = $region13
    $region12: #{tpu_custom_call.1} parent=1 // pred_region
      %s42 = ssub.s32 1024, 1024
      %43 = vsyncadd [#allocation6], %s42
      %s44 = sshll.u32 [#allocation7], 4
      %s45 = int_to_ptr.vmem [resolvable:$true] %s44
      %50 = dma.hbm_to_vmem [thread:$0]  %s2, 1024, %s45, [#allocation6], 64, 64, 4
    $region13: #{tpu_custom_call.1} parent=1 // pred_fallthru
      _
    // Predicated region
    $region14: #{tpu_custom_call.1} parent=1 // pred_check
      _
    $region15: #{tpu_custom_call.1} parent=1 // pred_check_branch
      %52 = sbr.rel (0) target = $region17
    $region16: #{tpu_custom_call.1} parent=1 // pred_region
      _
    $region17: #{tpu_custom_call.1} parent=1 // pred_fallthru
      _
    // Predicated region
    $region18: #{tpu_custom_call.1} parent=1 // pred_check
      _
    $region19: #{tpu_custom_call.1} parent=1 // pred_check_branch
      %54 = sbr.rel (0) target = $region21
    $region20: #{tpu_custom_call.1} parent=1 // pred_region
      %s56 = ssub.s32 1024, 1024
      %57 = vsyncadd [#allocation9], %s56
      %s58 = sshll.u32 [#allocation8], 4
      %s59 = int_to_ptr.vmem [resolvable:$true] %s58
      %64 = dma.hbm_to_vmem [thread:$0]  %s4, 1024, %s59, [#allocation9], 64, 64, 4
    $region21: #{tpu_custom_call.1} parent=1 // pred_fallthru
      _
    // Predicated region
    $region22: #{tpu_custom_call.1} parent=1 // pred_check
      _
    $region23: #{tpu_custom_call.1} parent=1 // pred_check_branch
      %66 = sbr.rel (0) target = $region25
    $region24: #{tpu_custom_call.1} parent=1 // pred_region
      _
    $region25: #{tpu_custom_call.1} parent=1 // pred_fallthru
      _
    // Predicated region
    $region26: #{tpu_custom_call.1} parent=1 // pred_check
      _
    $region27: #{tpu_custom_call.1} parent=1 // pred_check_branch
      %68 = sbr.rel (0) target = $region29
    $region28: #{tpu_custom_call.1} parent=1 // pred_region
      %69 = dma.done [#allocation3], 1024
    $region29: #{tpu_custom_call.1} parent=1 // pred_fallthru
      _
    // Predicated region
    $region30: #{tpu_custom_call.1} parent=1 // pred_check
      _
    $region31: #{tpu_custom_call.1} parent=1 // pred_check_branch
      %71 = sbr.rel (0) target = $region33
    $region32: #{tpu_custom_call.1} parent=1 // pred_region
      %72 = dma.done [#allocation6], 1024
    $region33: #{tpu_custom_call.1} parent=1 // pred_fallthru
      _
    // Predicated region
    $region34: #{tpu_custom_call.1} parent=1 // pred_check
      _
    $region35: #{tpu_custom_call.1} parent=1 // pred_check_branch
      %74 = sbr.rel (0) target = $region37
    $region36: #{tpu_custom_call.1} parent=1 // pred_region
      %75 = dma.done [#allocation6], 1024
    $region37: #{tpu_custom_call.1} parent=1 // pred_fallthru
      _
    // Predicated region
    $region38: #{tpu_custom_call.1} parent=1 // pred_check
      _
    $region39: #{tpu_custom_call.1} parent=1 // pred_check_branch
      %77 = sbr.rel (0) target = $region41
    $region40: #{tpu_custom_call.1} parent=1 // pred_region
      %78 = dma.done [#allocation9], 1024
    $region41: #{tpu_custom_call.1} parent=1 // pred_fallthru
      _
    %v80 = vld [vmem:[#allocation2] sm:$0xf]
    %v81 = vld [vmem:[#allocation2 + $0x4] sm:$0xf]
    %v82 = vld [vmem:[#allocation2 + $0x8] sm:$0xf]
    %v83 = vld [vmem:[#allocation2 + $0xc] sm:$0xf]
    %v84 = vld [vmem:[#allocation2 + $0x10] sm:$0xf]
    %v85 = vld [vmem:[#allocation2 + $0x14] sm:$0xf]
    %v86 = vld [vmem:[#allocation2 + $0x18] sm:$0xf]
    %v87 = vld [vmem:[#allocation2 + $0x1c] sm:$0xf]
    %v88 = vld [vmem:[#allocation2 + $0x20] sm:$0xf]
    %v89 = vld [vmem:[#allocation2 + $0x24] sm:$0xf]
    %v90 = vld [vmem:[#allocation2 + $0x28] sm:$0xf]
    %v91 = vld [vmem:[#allocation2 + $0x2c] sm:$0xf]
    %v92 = vld [vmem:[#allocation2 + $0x30] sm:$0xf]
    %v93 = vld [vmem:[#allocation2 + $0x34] sm:$0xf]
    %v94 = vld [vmem:[#allocation2 + $0x38] sm:$0xf]
    %v95 = vld [vmem:[#allocation2 + $0x3c] sm:$0xf]
    %v96 = vld [vmem:[#allocation5] sm:$0xf]
    %v97 = vld [vmem:[#allocation5 + $0x4] sm:$0xf]
    %v98 = vld [vmem:[#allocation5 + $0x8] sm:$0xf]
    %v99 = vld [vmem:[#allocation5 + $0xc] sm:$0xf]
    %v100 = vld [vmem:[#allocation5 + $0x10] sm:$0xf]
    %v101 = vld [vmem:[#allocation5 + $0x14] sm:$0xf]
    %v102 = vld [vmem:[#allocation5 + $0x18] sm:$0xf]
    %v103 = vld [vmem:[#allocation5 + $0x1c] sm:$0xf]
    %v104 = vld [vmem:[#allocation5 + $0x20] sm:$0xf]
    %v105 = vld [vmem:[#allocation5 + $0x24] sm:$0xf]
    %v106 = vld [vmem:[#allocation5 + $0x28] sm:$0xf]
    %v107 = vld [vmem:[#allocation5 + $0x2c] sm:$0xf]
    %v108 = vld [vmem:[#allocation5 + $0x30] sm:$0xf]
    %v109 = vld [vmem:[#allocation5 + $0x34] sm:$0xf]
    %v110 = vld [vmem:[#allocation5 + $0x38] sm:$0xf]
    %v111 = vld [vmem:[#allocation5 + $0x3c] sm:$0xf]
    %v112 = vld [vmem:[#allocation7] sm:$0xf]
    %v113 = vld [vmem:[#allocation7 + $0x4] sm:$0xf]
    %v114 = vld [vmem:[#allocation7 + $0x8] sm:$0xf]
    %v115 = vld [vmem:[#allocation7 + $0xc] sm:$0xf]
    %v116 = vld [vmem:[#allocation7 + $0x10] sm:$0xf]
    %v117 = vld [vmem:[#allocation7 + $0x14] sm:$0xf]
    %v118 = vld [vmem:[#allocation7 + $0x18] sm:$0xf]
    %v119 = vld [vmem:[#allocation7 + $0x1c] sm:$0xf]
    %v120 = vld [vmem:[#allocation7 + $0x20] sm:$0xf]
    %v121 = vld [vmem:[#allocation7 + $0x24] sm:$0xf]
    %v122 = vld [vmem:[#allocation7 + $0x28] sm:$0xf]
    %v123 = vld [vmem:[#allocation7 + $0x2c] sm:$0xf]
    %v124 = vld [vmem:[#allocation7 + $0x30] sm:$0xf]
    %v125 = vld [vmem:[#allocation7 + $0x34] sm:$0xf]
    %v126 = vld [vmem:[#allocation7 + $0x38] sm:$0xf]
    %v127 = vld [vmem:[#allocation7 + $0x3c] sm:$0xf]
    %v128 = vld [vmem:[%s3] sm:$0x1]
    %v145 = vunpack.c.l.b16 %v96
    %v146 = vunpack.c.l.b16 %v97
    %v147 = vunpack.c.l.b16 %v98
    %v148 = vunpack.c.l.b16 %v99
    %v149 = vunpack.c.l.b16 %v100
    %v150 = vunpack.c.l.b16 %v101
    %v151 = vunpack.c.l.b16 %v102
    %v152 = vunpack.c.l.b16 %v103
    %v153 = vunpack.c.l.b16 %v104
    %v154 = vunpack.c.l.b16 %v105
    %v155 = vunpack.c.l.b16 %v106
    %v156 = vunpack.c.l.b16 %v107
    %v157 = vunpack.c.l.b16 %v108
    %v158 = vunpack.c.l.b16 %v109
    %v159 = vunpack.c.l.b16 %v110
    %v160 = vunpack.c.l.b16 %v111
    %v161 = vpack.c.b16 %v146, %v145
    %v162 = vpack.c.b16 %v148, %v147
    %v163 = vpack.c.b16 %v150, %v149
    %v164 = vpack.c.b16 %v152, %v151
    %v165 = vpack.c.b16 %v154, %v153
    %v166 = vpack.c.b16 %v156, %v155
    %v167 = vpack.c.b16 %v158, %v157
    %v168 = vpack.c.b16 %v160, %v159
    %v193 = vunpack.c.l.b16 %v112
    %v194 = vunpack.c.l.b16 %v113
    %v195 = vunpack.c.l.b16 %v114
    %v196 = vunpack.c.l.b16 %v115
    %v197 = vunpack.c.l.b16 %v116
    %v198 = vunpack.c.l.b16 %v117
    %v199 = vunpack.c.l.b16 %v118
    %v200 = vunpack.c.l.b16 %v119
    %v201 = vunpack.c.l.b16 %v120
    %v202 = vunpack.c.l.b16 %v121
    %v203 = vunpack.c.l.b16 %v122
    %v204 = vunpack.c.l.b16 %v123
    %v205 = vunpack.c.l.b16 %v124
    %v206 = vunpack.c.l.b16 %v125
    %v207 = vunpack.c.l.b16 %v126
    %v208 = vunpack.c.l.b16 %v127
    %v209 = vpack.c.b16 %v194, %v193
    %v210 = vpack.c.b16 %v196, %v195
    %v211 = vpack.c.b16 %v198, %v197
    %v212 = vpack.c.b16 %v200, %v199
    %v213 = vpack.c.b16 %v202, %v201
    %v214 = vpack.c.b16 %v204, %v203
    %v215 = vpack.c.b16 %v206, %v205
    %v216 = vpack.c.b16 %v208, %v207
    %225 = vmatprep.subr.bf16.mxu0 0
    %226 = vmatpush1.bf16.msra.mxu0 %v209
    %227 = vmatprep.subr.bf16.mxu0 0
    %228 = vmatpush1.bf16.msra.mxu0 %v210
    %229 = vmatprep.subr.bf16.mxu0 0
    %230 = vmatpush1.bf16.msra.mxu0 %v211
    %231 = vmatprep.subr.bf16.mxu0 0
    %232 = vmatpush1.bf16.msra.mxu0 %v212
    %233 = vmatprep.subr.bf16.mxu0 0
    %234 = vmatpush1.bf16.msra.mxu0 %v213
    %235 = vmatprep.subr.bf16.mxu0 0
    %236 = vmatpush1.bf16.msra.mxu0 %v214
    %237 = vmatprep.subr.bf16.mxu0 0
    %238 = vmatpush1.bf16.msra.mxu0 %v215
    %239 = vmatprep.subr.bf16.mxu0 0
    %240 = vmatpush1.bf16.msra.mxu0 %v216
    %241 = vmatprep.subr.bf16.mxu0 0
    %242 = vmatpush1.bf16.msra.mxu0 0
    %243 = vmatprep.subr.bf16.mxu0 0
    %244 = vmatpush1.bf16.msra.mxu0 0
    %245 = vmatprep.subr.bf16.mxu0 0
    %246 = vmatpush1.bf16.msra.mxu0 0
    %247 = vmatprep.subr.bf16.mxu0 0
    %248 = vmatpush1.bf16.msra.mxu0 0
    %249 = vmatprep.subr.bf16.mxu0 0
    %250 = vmatpush1.bf16.msra.mxu0 0
    %251 = vmatprep.subr.bf16.mxu0 0
    %252 = vmatpush1.bf16.msra.mxu0 0
    %253 = vmatprep.subr.bf16.mxu0 0
    %254 = vmatpush1.bf16.msra.mxu0 0
    %255 = vmatprep.subr.bf16.mxu0 0
    %256 = vmatpush1.bf16.msra.mxu0 0
    %257 = vmatprep.mubr.bf16.mxu0 0
    %258 = vmatmul.mubr.bf16.gmra.mrb[0].mxu0 %v161
    %v259 = vpop.f32.mrb[0].mxu0
    %v260 = vadd.f32 0.0, %v259
    %v261 = vpop.f32.mrb[0].mxu0
    %v262 = vpop.f32.mrb[0].mxu0
    %v263 = vadd.f32 0.0, %v262
    %v264 = vpop.f32.mrb[0].mxu0
    %265 = vmatprep.mubr.bf16.mxu0 0
    %266 = vmatmul.mubr.bf16.gmra.mrb[0].mxu0 %v162
    %v267 = vpop.f32.mrb[0].mxu0
    %v268 = vadd.f32 0.0, %v267
    %v269 = vpop.f32.mrb[0].mxu0
    %v270 = vpop.f32.mrb[0].mxu0
    %v271 = vadd.f32 0.0, %v270
    %v272 = vpop.f32.mrb[0].mxu0
    %273 = vmatprep.mubr.bf16.mxu0 0
    %274 = vmatmul.mubr.bf16.gmra.mrb[0].mxu0 %v163
    %v275 = vpop.f32.mrb[0].mxu0
    %v276 = vadd.f32 0.0, %v275
    %v277 = vpop.f32.mrb[0].mxu0
    %v278 = vpop.f32.mrb[0].mxu0
    %v279 = vadd.f32 0.0, %v278
    %v280 = vpop.f32.mrb[0].mxu0
    %281 = vmatprep.mubr.bf16.mxu0 0
    %282 = vmatmul.mubr.bf16.gmra.mrb[0].mxu0 %v164
    %v283 = vpop.f32.mrb[0].mxu0
    %v284 = vadd.f32 0.0, %v283
    %v285 = vpop.f32.mrb[0].mxu0
    %v286 = vpop.f32.mrb[0].mxu0
    %v287 = vadd.f32 0.0, %v286
    %v288 = vpop.f32.mrb[0].mxu0
    %289 = vmatprep.mubr.bf16.mxu0 0
    %290 = vmatmul.mubr.bf16.gmra.mrb[0].mxu0 %v165
    %v291 = vpop.f32.mrb[0].mxu0
    %v292 = vadd.f32 0.0, %v291
    %v293 = vpop.f32.mrb[0].mxu0
    %v294 = vpop.f32.mrb[0].mxu0
    %v295 = vadd.f32 0.0, %v294
    %v296 = vpop.f32.mrb[0].mxu0
    %297 = vmatprep.mubr.bf16.mxu0 0
    %298 = vmatmul.mubr.bf16.gmra.mrb[0].mxu0 %v166
    %v299 = vpop.f32.mrb[0].mxu0
    %v300 = vadd.f32 0.0, %v299
    %v301 = vpop.f32.mrb[0].mxu0
    %v302 = vpop.f32.mrb[0].mxu0
    %v303 = vadd.f32 0.0, %v302
    %v304 = vpop.f32.mrb[0].mxu0
    %305 = vmatprep.mubr.bf16.mxu0 0
    %306 = vmatmul.mubr.bf16.gmra.mrb[0].mxu0 %v167
    %v307 = vpop.f32.mrb[0].mxu0
    %v308 = vadd.f32 0.0, %v307
    %v309 = vpop.f32.mrb[0].mxu0
    %v310 = vpop.f32.mrb[0].mxu0
    %v311 = vadd.f32 0.0, %v310
    %v312 = vpop.f32.mrb[0].mxu0
    %313 = vmatprep.mubr.bf16.mxu0 0
    %314 = vmatmul.mubr.bf16.gmra.mrb[0].mxu0 %v168
    %v315 = vpop.f32.mrb[0].mxu0
    %v316 = vadd.f32 0.0, %v315
    %v317 = vpop.f32.mrb[0].mxu0
    %v318 = vpop.f32.mrb[0].mxu0
    %v319 = vadd.f32 0.0, %v318
    %v320 = vpop.f32.mrb[0].mxu0
    %321 = vdwg.mxu0
    %v322 = vpack.c.bf16 %v263, %v260
    %v323 = vpack.c.bf16 %v271, %v268
    %v324 = vpack.c.bf16 %v279, %v276
    %v325 = vpack.c.bf16 %v287, %v284
    %v326 = vpack.c.bf16 %v295, %v292
    %v327 = vpack.c.bf16 %v303, %v300
    %v328 = vpack.c.bf16 %v311, %v308
    %v329 = vpack.c.bf16 %v319, %v316
    %v331 = vlaneseq
    %v332 = vshrl.u32 %v331, 7
    %v333 = vsub.s32 0, %v332
    %v334 = vrot.slane %v128, %v333
    %v352 = vunpack.c.l.b16 %v80
    %v353 = vunpack.c.l.b16 %v81
    %v354 = vunpack.c.l.b16 %v82
    %v355 = vunpack.c.l.b16 %v83
    %v356 = vunpack.c.l.b16 %v84
    %v357 = vunpack.c.l.b16 %v85
    %v358 = vunpack.c.l.b16 %v86
    %v359 = vunpack.c.l.b16 %v87
    %v360 = vunpack.c.l.b16 %v88
    %v361 = vunpack.c.l.b16 %v89
    %v362 = vunpack.c.l.b16 %v90
    %v363 = vunpack.c.l.b16 %v91
    %v364 = vunpack.c.l.b16 %v92
    %v365 = vunpack.c.l.b16 %v93
    %v366 = vunpack.c.l.b16 %v94
    %v367 = vunpack.c.l.b16 %v95
    %v368 = vpack.c.b16 %v353, %v352
    %v369 = vpack.c.b16 %v355, %v354
    %v370 = vpack.c.b16 %v357, %v356
    %v371 = vpack.c.b16 %v359, %v358
    %v372 = vpack.c.b16 %v361, %v360
    %v373 = vpack.c.b16 %v363, %v362
    %v374 = vpack.c.b16 %v365, %v364
    %v375 = vpack.c.b16 %v367, %v366
    %384 = vmatprep.subr.bf16.mxu0 0
    %385 = vmatpush1.bf16.msra.mxu0 %v322
    %386 = vmatprep.subr.bf16.mxu0 0
    %387 = vmatpush1.bf16.msra.mxu0 %v323
    %388 = vmatprep.subr.bf16.mxu0 0
    %389 = vmatpush1.bf16.msra.mxu0 %v324
    %390 = vmatprep.subr.bf16.mxu0 0
    %391 = vmatpush1.bf16.msra.mxu0 %v325
    %392 = vmatprep.subr.bf16.mxu0 0
    %393 = vmatpush1.bf16.msra.mxu0 %v326
    %394 = vmatprep.subr.bf16.mxu0 0
    %395 = vmatpush1.bf16.msra.mxu0 %v327
    %396 = vmatprep.subr.bf16.mxu0 0
    %397 = vmatpush1.bf16.msra.mxu0 %v328
    %398 = vmatprep.subr.bf16.mxu0 0
    %399 = vmatpush1.bf16.msra.mxu0 %v329
    %400 = vmatprep.subr.bf16.mxu0 0
    %401 = vmatpush1.bf16.msra.mxu0 0
    %402 = vmatprep.subr.bf16.mxu0 0
    %403 = vmatpush1.bf16.msra.mxu0 0
    %404 = vmatprep.subr.bf16.mxu0 0
    %405 = vmatpush1.bf16.msra.mxu0 0
    %406 = vmatprep.subr.bf16.mxu0 0
    %407 = vmatpush1.bf16.msra.mxu0 0
    %408 = vmatprep.subr.bf16.mxu0 0
    %409 = vmatpush1.bf16.msra.mxu0 0
    %410 = vmatprep.subr.bf16.mxu0 0
    %411 = vmatpush1.bf16.msra.mxu0 0
    %412 = vmatprep.subr.bf16.mxu0 0
    %413 = vmatpush1.bf16.msra.mxu0 0
    %414 = vmatprep.subr.bf16.mxu0 0
    %415 = vmatpush1.bf16.msra.mxu0 0
    %416 = vmatprep.mubr.bf16.mxu0 0
    %417 = vmatmul.mubr.bf16.gmra.mrb[0].mxu0 %v368
    %v418 = vpop.f32.mrb[0].mxu0
    %v419 = vadd.f32 %v334, %v418
    %v420 = vpop.f32.mrb[0].mxu0
    %v421 = vpop.f32.mrb[0].mxu0
    %v422 = vadd.f32 %v334, %v421
    %v423 = vpop.f32.mrb[0].mxu0
    %424 = vmatprep.mubr.bf16.mxu0 0
    %425 = vmatmul.mubr.bf16.gmra.mrb[0].mxu0 %v369
    %v426 = vpop.f32.mrb[0].mxu0
    %v427 = vadd.f32 %v334, %v426
    %v428 = vpop.f32.mrb[0].mxu0
    %v429 = vpop.f32.mrb[0].mxu0
    %v430 = vadd.f32 %v334, %v429
    %v431 = vpop.f32.mrb[0].mxu0
    %432 = vmatprep.mubr.bf16.mxu0 0
    %433 = vmatmul.mubr.bf16.gmra.mrb[0].mxu0 %v370
    %v434 = vpop.f32.mrb[0].mxu0
    %v435 = vadd.f32 %v334, %v434
    %v436 = vpop.f32.mrb[0].mxu0
    %v437 = vpop.f32.mrb[0].mxu0
    %v438 = vadd.f32 %v334, %v437
    %v439 = vpop.f32.mrb[0].mxu0
    %440 = vmatprep.mubr.bf16.mxu0 0
    %441 = vmatmul.mubr.bf16.gmra.mrb[0].mxu0 %v371
    %v442 = vpop.f32.mrb[0].mxu0
    %v443 = vadd.f32 %v334, %v442
    %v444 = vpop.f32.mrb[0].mxu0
    %v445 = vpop.f32.mrb[0].mxu0
    %v446 = vadd.f32 %v334, %v445
    %v447 = vpop.f32.mrb[0].mxu0
    %448 = vmatprep.mubr.bf16.mxu0 0
    %449 = vmatmul.mubr.bf16.gmra.mrb[0].mxu0 %v372
    %v450 = vpop.f32.mrb[0].mxu0
    %v451 = vadd.f32 %v334, %v450
    %v452 = vpop.f32.mrb[0].mxu0
    %v453 = vpop.f32.mrb[0].mxu0
    %v454 = vadd.f32 %v334, %v453
    %v455 = vpop.f32.mrb[0].mxu0
    %456 = vmatprep.mubr.bf16.mxu0 0
    %457 = vmatmul.mubr.bf16.gmra.mrb[0].mxu0 %v373
    %v458 = vpop.f32.mrb[0].mxu0
    %v459 = vadd.f32 %v334, %v458
    %v460 = vpop.f32.mrb[0].mxu0
    %v461 = vpop.f32.mrb[0].mxu0
    %v462 = vadd.f32 %v334, %v461
    %v463 = vpop.f32.mrb[0].mxu0
    %464 = vmatprep.mubr.bf16.mxu0 0
    %465 = vmatmul.mubr.bf16.gmra.mrb[0].mxu0 %v374
    %v466 = vpop.f32.mrb[0].mxu0
    %v467 = vadd.f32 %v334, %v466
    %v468 = vpop.f32.mrb[0].mxu0
    %v469 = vpop.f32.mrb[0].mxu0
    %v470 = vadd.f32 %v334, %v469
    %v471 = vpop.f32.mrb[0].mxu0
    %472 = vmatprep.mubr.bf16.mxu0 0
    %473 = vmatmul.mubr.bf16.gmra.mrb[0].mxu0 %v375
    %v474 = vpop.f32.mrb[0].mxu0
    %v475 = vadd.f32 %v334, %v474
    %v476 = vpop.f32.mrb[0].mxu0
    %v477 = vpop.f32.mrb[0].mxu0
    %v478 = vadd.f32 %v334, %v477
    %v479 = vpop.f32.mrb[0].mxu0
    %480 = vdwg.mxu0
    %v481 = vmax.f32 %v419, 0.0
    %v482 = vmax.f32 %v422, 0.0
    %v483 = vmax.f32 %v427, 0.0
    %v484 = vmax.f32 %v430, 0.0
    %v485 = vmax.f32 %v435, 0.0
    %v486 = vmax.f32 %v438, 0.0
    %v487 = vmax.f32 %v443, 0.0
    %v488 = vmax.f32 %v446, 0.0
    %v489 = vmax.f32 %v451, 0.0
    %v490 = vmax.f32 %v454, 0.0
    %v491 = vmax.f32 %v459, 0.0
    %v492 = vmax.f32 %v462, 0.0
    %v493 = vmax.f32 %v467, 0.0
    %v494 = vmax.f32 %v470, 0.0
    %v495 = vmax.f32 %v475, 0.0
    %v496 = vmax.f32 %v478, 0.0
    %v497 = vpack.c.bf16 %v482, %v481
    %v498 = vpack.c.bf16 %v484, %v483
    %v499 = vpack.c.bf16 %v486, %v485
    %v500 = vpack.c.bf16 %v488, %v487
    %v501 = vpack.c.bf16 %v490, %v489
    %v502 = vpack.c.bf16 %v492, %v491
    %v503 = vpack.c.bf16 %v494, %v493
    %v504 = vpack.c.bf16 %v496, %v495
    %v505 = vld [vmem:[#allocation8] sm:$0xf]
    %v506 = vld [vmem:[#allocation8 + $0x4] sm:$0xf]
    %v507 = vld [vmem:[#allocation8 + $0x8] sm:$0xf]
    %v508 = vld [vmem:[#allocation8 + $0xc] sm:$0xf]
    %v509 = vld [vmem:[#allocation8 + $0x10] sm:$0xf]
    %v510 = vld [vmem:[#allocation8 + $0x14] sm:$0xf]
    %v511 = vld [vmem:[#allocation8 + $0x18] sm:$0xf]
    %v512 = vld [vmem:[#allocation8 + $0x1c] sm:$0xf]
    %v513 = vld [vmem:[#allocation8 + $0x20] sm:$0xf]
    %v514 = vld [vmem:[#allocation8 + $0x24] sm:$0xf]
    %v515 = vld [vmem:[#allocation8 + $0x28] sm:$0xf]
    %v516 = vld [vmem:[#allocation8 + $0x2c] sm:$0xf]
    %v517 = vld [vmem:[#allocation8 + $0x30] sm:$0xf]
    %v518 = vld [vmem:[#allocation8 + $0x34] sm:$0xf]
    %v519 = vld [vmem:[#allocation8 + $0x38] sm:$0xf]
    %v520 = vld [vmem:[#allocation8 + $0x3c] sm:$0xf]
    %v521 = vld [vmem:[%s5] sm:$0x1]
    %v538 = vunpack.c.l.b16 %v505
    %v539 = vunpack.c.l.b16 %v506
    %v540 = vunpack.c.l.b16 %v507
    %v541 = vunpack.c.l.b16 %v508
    %v542 = vunpack.c.l.b16 %v509
    %v543 = vunpack.c.l.b16 %v510
    %v544 = vunpack.c.l.b16 %v511
    %v545 = vunpack.c.l.b16 %v512
    %v546 = vunpack.c.l.b16 %v513
    %v547 = vunpack.c.l.b16 %v514
    %v548 = vunpack.c.l.b16 %v515
    %v549 = vunpack.c.l.b16 %v516
    %v550 = vunpack.c.l.b16 %v517
    %v551 = vunpack.c.l.b16 %v518
    %v552 = vunpack.c.l.b16 %v519
    %v553 = vunpack.c.l.b16 %v520
    %v554 = vpack.c.b16 %v539, %v538
    %v555 = vpack.c.b16 %v541, %v540
    %v556 = vpack.c.b16 %v543, %v542
    %v557 = vpack.c.b16 %v545, %v544
    %v558 = vpack.c.b16 %v547, %v546
    %v559 = vpack.c.b16 %v549, %v548
    %v560 = vpack.c.b16 %v551, %v550
    %v561 = vpack.c.b16 %v553, %v552
    %570 = vmatprep.subr.bf16.mxu0 0
    %571 = vmatpush1.bf16.msra.mxu0 %v554
    %572 = vmatprep.subr.bf16.mxu0 0
    %573 = vmatpush1.bf16.msra.mxu0 %v555
    %574 = vmatprep.subr.bf16.mxu0 0
    %575 = vmatpush1.bf16.msra.mxu0 %v556
    %576 = vmatprep.subr.bf16.mxu0 0
    %577 = vmatpush1.bf16.msra.mxu0 %v557
    %578 = vmatprep.subr.bf16.mxu0 0
    %579 = vmatpush1.bf16.msra.mxu0 %v558
    %580 = vmatprep.subr.bf16.mxu0 0
    %581 = vmatpush1.bf16.msra.mxu0 %v559
    %582 = vmatprep.subr.bf16.mxu0 0
    %583 = vmatpush1.bf16.msra.mxu0 %v560
    %584 = vmatprep.subr.bf16.mxu0 0
    %585 = vmatpush1.bf16.msra.mxu0 %v561
    %586 = vmatprep.subr.bf16.mxu0 0
    %587 = vmatpush1.bf16.msra.mxu0 0
    %588 = vmatprep.subr.bf16.mxu0 0
    %589 = vmatpush1.bf16.msra.mxu0 0
    %590 = vmatprep.subr.bf16.mxu0 0
    %591 = vmatpush1.bf16.msra.mxu0 0
    %592 = vmatprep.subr.bf16.mxu0 0
    %593 = vmatpush1.bf16.msra.mxu0 0
    %594 = vmatprep.subr.bf16.mxu0 0
    %595 = vmatpush1.bf16.msra.mxu0 0
    %596 = vmatprep.subr.bf16.mxu0 0
    %597 = vmatpush1.bf16.msra.mxu0 0
    %598 = vmatprep.subr.bf16.mxu0 0
    %599 = vmatpush1.bf16.msra.mxu0 0
    %600 = vmatprep.subr.bf16.mxu0 0
    %601 = vmatpush1.bf16.msra.mxu0 0
    %602 = vmatprep.mubr.bf16.mxu0 0
    %603 = vmatmul.mubr.bf16.gmra.mrb[0].mxu0 %v497
    %v604 = vpop.f32.mrb[0].mxu0
    %v605 = vadd.f32 0.0, %v604
    %v606 = vpop.f32.mrb[0].mxu0
    %v607 = vpop.f32.mrb[0].mxu0
    %v608 = vadd.f32 0.0, %v607
    %v609 = vpop.f32.mrb[0].mxu0
    %610 = vmatprep.mubr.bf16.mxu0 0
    %611 = vmatmul.mubr.bf16.gmra.mrb[0].mxu0 %v498
    %v612 = vpop.f32.mrb[0].mxu0
    %v613 = vadd.f32 0.0, %v612
    %v614 = vpop.f32.mrb[0].mxu0
    %v615 = vpop.f32.mrb[0].mxu0
    %v616 = vadd.f32 0.0, %v615
    %v617 = vpop.f32.mrb[0].mxu0
    %618 = vmatprep.mubr.bf16.mxu0 0
    %619 = vmatmul.mubr.bf16.gmra.mrb[0].mxu0 %v499
    %v620 = vpop.f32.mrb[0].mxu0
    %v621 = vadd.f32 0.0, %v620
    %v622 = vpop.f32.mrb[0].mxu0
    %v623 = vpop.f32.mrb[0].mxu0
    %v624 = vadd.f32 0.0, %v623
    %v625 = vpop.f32.mrb[0].mxu0
    %626 = vmatprep.mubr.bf16.mxu0 0
    %627 = vmatmul.mubr.bf16.gmra.mrb[0].mxu0 %v500
    %v628 = vpop.f32.mrb[0].mxu0
    %v629 = vadd.f32 0.0, %v628
    %v630 = vpop.f32.mrb[0].mxu0
    %v631 = vpop.f32.mrb[0].mxu0
    %v632 = vadd.f32 0.0, %v631
    %v633 = vpop.f32.mrb[0].mxu0
    %634 = vmatprep.mubr.bf16.mxu0 0
    %635 = vmatmul.mubr.bf16.gmra.mrb[0].mxu0 %v501
    %v636 = vpop.f32.mrb[0].mxu0
    %v637 = vadd.f32 0.0, %v636
    %v638 = vpop.f32.mrb[0].mxu0
    %v639 = vpop.f32.mrb[0].mxu0
    %v640 = vadd.f32 0.0, %v639
    %v641 = vpop.f32.mrb[0].mxu0
    %642 = vmatprep.mubr.bf16.mxu0 0
    %643 = vmatmul.mubr.bf16.gmra.mrb[0].mxu0 %v502
    %v644 = vpop.f32.mrb[0].mxu0
    %v645 = vadd.f32 0.0, %v644
    %v646 = vpop.f32.mrb[0].mxu0
    %v647 = vpop.f32.mrb[0].mxu0
    %v648 = vadd.f32 0.0, %v647
    %v649 = vpop.f32.mrb[0].mxu0
    %650 = vmatprep.mubr.bf16.mxu0 0
    %651 = vmatmul.mubr.bf16.gmra.mrb[0].mxu0 %v503
    %v652 = vpop.f32.mrb[0].mxu0
    %v653 = vadd.f32 0.0, %v652
    %v654 = vpop.f32.mrb[0].mxu0
    %v655 = vpop.f32.mrb[0].mxu0
    %v656 = vadd.f32 0.0, %v655
    %v657 = vpop.f32.mrb[0].mxu0
    %658 = vmatprep.mubr.bf16.mxu0 0
    %659 = vmatmul.mubr.bf16.gmra.mrb[0].mxu0 %v504
    %v660 = vpop.f32.mrb[0].mxu0
    %v661 = vadd.f32 0.0, %v660
    %v662 = vpop.f32.mrb[0].mxu0
    %v663 = vpop.f32.mrb[0].mxu0
    %v664 = vadd.f32 0.0, %v663
    %v665 = vpop.f32.mrb[0].mxu0
    %666 = vdwg.mxu0
    %v667 = vpack.c.bf16 %v608, %v605
    %v668 = vpack.c.bf16 %v616, %v613
    %v669 = vpack.c.bf16 %v624, %v621
    %v670 = vpack.c.bf16 %v632, %v629
    %v671 = vpack.c.bf16 %v640, %v637
    %v672 = vpack.c.bf16 %v648, %v645
    %v673 = vpack.c.bf16 %v656, %v653
    %v674 = vpack.c.bf16 %v664, %v661
    %v676 = vlaneseq
    %v677 = vshrl.u32 %v676, 7
    %v678 = vsub.s32 0, %v677
    %v679 = vrot.slane %v521, %v678
    %681 = vmatprep.subr.bf16.mxu0 0
    %682 = vmatpush1.bf16.msra.mxu0 %v667
    %683 = vmatprep.subr.bf16.mxu0 0
    %684 = vmatpush1.bf16.msra.mxu0 %v668
    %685 = vmatprep.subr.bf16.mxu0 0
    %686 = vmatpush1.bf16.msra.mxu0 %v669
    %687 = vmatprep.subr.bf16.mxu0 0
    %688 = vmatpush1.bf16.msra.mxu0 %v670
    %689 = vmatprep.subr.bf16.mxu0 0
    %690 = vmatpush1.bf16.msra.mxu0 %v671
    %691 = vmatprep.subr.bf16.mxu0 0
    %692 = vmatpush1.bf16.msra.mxu0 %v672
    %693 = vmatprep.subr.bf16.mxu0 0
    %694 = vmatpush1.bf16.msra.mxu0 %v673
    %695 = vmatprep.subr.bf16.mxu0 0
    %696 = vmatpush1.bf16.msra.mxu0 %v674
    %697 = vmatprep.subr.bf16.mxu0 0
    %698 = vmatpush1.bf16.msra.mxu0 0
    %699 = vmatprep.subr.bf16.mxu0 0
    %700 = vmatpush1.bf16.msra.mxu0 0
    %701 = vmatprep.subr.bf16.mxu0 0
    %702 = vmatpush1.bf16.msra.mxu0 0
    %703 = vmatprep.subr.bf16.mxu0 0
    %704 = vmatpush1.bf16.msra.mxu0 0
    %705 = vmatprep.subr.bf16.mxu0 0
    %706 = vmatpush1.bf16.msra.mxu0 0
    %707 = vmatprep.subr.bf16.mxu0 0
    %708 = vmatpush1.bf16.msra.mxu0 0
    %709 = vmatprep.subr.bf16.mxu0 0
    %710 = vmatpush1.bf16.msra.mxu0 0
    %711 = vmatprep.subr.bf16.mxu0 0
    %712 = vmatpush1.bf16.msra.mxu0 0
    %713 = vmatprep.mubr.bf16.mxu0 0
    %714 = vmatmul.mubr.bf16.gmra.mrb[0].mxu0 %v368
    %v715 = vpop.f32.mrb[0].mxu0
    %v716 = vadd.f32 %v679, %v715
    %v717 = vpop.f32.mrb[0].mxu0
    %v718 = vpop.f32.mrb[0].mxu0
    %v719 = vadd.f32 %v679, %v718
    %v720 = vpop.f32.mrb[0].mxu0
    %721 = vmatprep.mubr.bf16.mxu0 0
    %722 = vmatmul.mubr.bf16.gmra.mrb[0].mxu0 %v369
    %v723 = vpop.f32.mrb[0].mxu0
    %v724 = vadd.f32 %v679, %v723
    %v725 = vpop.f32.mrb[0].mxu0
    %v726 = vpop.f32.mrb[0].mxu0
    %v727 = vadd.f32 %v679, %v726
    %v728 = vpop.f32.mrb[0].mxu0
    %729 = vmatprep.mubr.bf16.mxu0 0
    %730 = vmatmul.mubr.bf16.gmra.mrb[0].mxu0 %v370
    %v731 = vpop.f32.mrb[0].mxu0
    %v732 = vadd.f32 %v679, %v731
    %v733 = vpop.f32.mrb[0].mxu0
    %v734 = vpop.f32.mrb[0].mxu0
    %v735 = vadd.f32 %v679, %v734
    %v736 = vpop.f32.mrb[0].mxu0
    %737 = vmatprep.mubr.bf16.mxu0 0
    %738 = vmatmul.mubr.bf16.gmra.mrb[0].mxu0 %v371
    %v739 = vpop.f32.mrb[0].mxu0
    %v740 = vadd.f32 %v679, %v739
    %v741 = vpop.f32.mrb[0].mxu0
    %v742 = vpop.f32.mrb[0].mxu0
    %v743 = vadd.f32 %v679, %v742
    %v744 = vpop.f32.mrb[0].mxu0
    %745 = vmatprep.mubr.bf16.mxu0 0
    %746 = vmatmul.mubr.bf16.gmra.mrb[0].mxu0 %v372
    %v747 = vpop.f32.mrb[0].mxu0
    %v748 = vadd.f32 %v679, %v747
    %v749 = vpop.f32.mrb[0].mxu0
    %v750 = vpop.f32.mrb[0].mxu0
    %v751 = vadd.f32 %v679, %v750
    %v752 = vpop.f32.mrb[0].mxu0
    %753 = vmatprep.mubr.bf16.mxu0 0
    %754 = vmatmul.mubr.bf16.gmra.mrb[0].mxu0 %v373
    %v755 = vpop.f32.mrb[0].mxu0
    %v756 = vadd.f32 %v679, %v755
    %v757 = vpop.f32.mrb[0].mxu0
    %v758 = vpop.f32.mrb[0].mxu0
    %v759 = vadd.f32 %v679, %v758
    %v760 = vpop.f32.mrb[0].mxu0
    %761 = vmatprep.mubr.bf16.mxu0 0
    %762 = vmatmul.mubr.bf16.gmra.mrb[0].mxu0 %v374
    %v763 = vpop.f32.mrb[0].mxu0
    %v764 = vadd.f32 %v679, %v763
    %v765 = vpop.f32.mrb[0].mxu0
    %v766 = vpop.f32.mrb[0].mxu0
    %v767 = vadd.f32 %v679, %v766
    %v768 = vpop.f32.mrb[0].mxu0
    %769 = vmatprep.mubr.bf16.mxu0 0
    %770 = vmatmul.mubr.bf16.gmra.mrb[0].mxu0 %v375
    %v771 = vpop.f32.mrb[0].mxu0
    %v772 = vadd.f32 %v679, %v771
    %v773 = vpop.f32.mrb[0].mxu0
    %v774 = vpop.f32.mrb[0].mxu0
    %v775 = vadd.f32 %v679, %v774
    %v776 = vpop.f32.mrb[0].mxu0
    %777 = vdwg.mxu0
    %v778 = vlaneseq
    %v779 = vand.u32 %v778, 127
    %vm780 = vcmp.lt.s32.totalorder %v779, 4
    %v781 = vsel %vm780, %v716, -1e+30
    %v782 = vsel %vm780, %v719, -1e+30
    %v783 = vsel %vm780, %v724, -1e+30
    %v784 = vsel %vm780, %v727, -1e+30
    %v785 = vsel %vm780, %v732, -1e+30
    %v786 = vsel %vm780, %v735, -1e+30
    %v787 = vsel %vm780, %v740, -1e+30
    %v788 = vsel %vm780, %v743, -1e+30
    %v789 = vsel %vm780, %v748, -1e+30
    %v790 = vsel %vm780, %v751, -1e+30
    %v791 = vsel %vm780, %v756, -1e+30
    %v792 = vsel %vm780, %v759, -1e+30
    %v793 = vsel %vm780, %v764, -1e+30
    %v794 = vsel %vm780, %v767, -1e+30
    %v795 = vsel %vm780, %v772, -1e+30
    %v796 = vsel %vm780, %v775, -1e+30
    %797 = vmax.xlane.f32.xlu0 %v781
    %v798 = vpop.xlane.xlu0 %797
    %799 = vmax.xlane.f32.xlu0 %v782
    %v800 = vpop.xlane.xlu0 %799
    %801 = vmax.xlane.f32.xlu0 %v783
    %v802 = vpop.xlane.xlu0 %801
    %803 = vmax.xlane.f32.xlu0 %v784
    %v804 = vpop.xlane.xlu0 %803
    %805 = vmax.xlane.f32.xlu0 %v785
    %v806 = vpop.xlane.xlu0 %805
    %807 = vmax.xlane.f32.xlu0 %v786
    %v808 = vpop.xlane.xlu0 %807
    %809 = vmax.xlane.f32.xlu0 %v787
    %v810 = vpop.xlane.xlu0 %809
    %811 = vmax.xlane.f32.xlu0 %v788
    %v812 = vpop.xlane.xlu0 %811
    %813 = vmax.xlane.f32.xlu0 %v789
    %v814 = vpop.xlane.xlu0 %813
    %815 = vmax.xlane.f32.xlu0 %v790
    %v816 = vpop.xlane.xlu0 %815
    %817 = vmax.xlane.f32.xlu0 %v791
    %v818 = vpop.xlane.xlu0 %817
    %819 = vmax.xlane.f32.xlu0 %v792
    %v820 = vpop.xlane.xlu0 %819
    %821 = vmax.xlane.f32.xlu0 %v793
    %v822 = vpop.xlane.xlu0 %821
    %823 = vmax.xlane.f32.xlu0 %v794
    %v824 = vpop.xlane.xlu0 %823
    %825 = vmax.xlane.f32.xlu0 %v795
    %v826 = vpop.xlane.xlu0 %825
    %827 = vmax.xlane.f32.xlu0 %v796
    %v828 = vpop.xlane.xlu0 %827
    %v829 = vsub.f32 %v781, %v798
    %v830 = vsub.f32 %v782, %v800
    %v831 = vsub.f32 %v783, %v802
    %v832 = vsub.f32 %v784, %v804
    %v833 = vsub.f32 %v785, %v806
    %v834 = vsub.f32 %v786, %v808
    %v835 = vsub.f32 %v787, %v810
    %v836 = vsub.f32 %v788, %v812
    %v837 = vsub.f32 %v789, %v814
    %v838 = vsub.f32 %v790, %v816
    %v839 = vsub.f32 %v791, %v818
    %v840 = vsub.f32 %v792, %v820
    %v841 = vsub.f32 %v793, %v822
    %v842 = vsub.f32 %v794, %v824
    %v843 = vsub.f32 %v795, %v826
    %v844 = vsub.f32 %v796, %v828
    %v845 = vmul.f32 %v829, 1.442695
    %v846 = vpow.pop %v845
    %v847 = vmul.f32 %v830, 1.442695
    %v848 = vpow.pop %v847
    %v849 = vmul.f32 %v831, 1.442695
    %v850 = vpow.pop %v849
    %v851 = vmul.f32 %v832, 1.442695
    %v852 = vpow.pop %v851
    %v853 = vmul.f32 %v833, 1.442695
    %v854 = vpow.pop %v853
    %v855 = vmul.f32 %v834, 1.442695
    %v856 = vpow.pop %v855
    %v857 = vmul.f32 %v835, 1.442695
    %v858 = vpow.pop %v857
    %v859 = vmul.f32 %v836, 1.442695
    %v860 = vpow.pop %v859
    %v861 = vmul.f32 %v837, 1.442695
    %v862 = vpow.pop %v861
    %v863 = vmul.f32 %v838, 1.442695
    %v864 = vpow.pop %v863
    %v865 = vmul.f32 %v839, 1.442695
    %v866 = vpow.pop %v865
    %v867 = vmul.f32 %v840, 1.442695
    %v868 = vpow.pop %v867
    %v869 = vmul.f32 %v841, 1.442695
    %v870 = vpow.pop %v869
    %v871 = vmul.f32 %v842, 1.442695
    %v872 = vpow.pop %v871
    %v873 = vmul.f32 %v843, 1.442695
    %v874 = vpow.pop %v873
    %v875 = vmul.f32 %v844, 1.442695
    %v876 = vpow.pop %v875
    %877 = vadd.xlane.f32.xlu0 %v846
    %v878 = vpop.xlane.xlu0 %877
    %879 = vadd.xlane.f32.xlu0 %v848
    %v880 = vpop.xlane.xlu0 %879
    %881 = vadd.xlane.f32.xlu0 %v850
    %v882 = vpop.xlane.xlu0 %881
    %883 = vadd.xlane.f32.xlu0 %v852
    %v884 = vpop.xlane.xlu0 %883
    %885 = vadd.xlane.f32.xlu0 %v854
    %v886 = vpop.xlane.xlu0 %885
    %887 = vadd.xlane.f32.xlu0 %v856
    %v888 = vpop.xlane.xlu0 %887
    %889 = vadd.xlane.f32.xlu0 %v858
    %v890 = vpop.xlane.xlu0 %889
    %891 = vadd.xlane.f32.xlu0 %v860
    %v892 = vpop.xlane.xlu0 %891
    %893 = vadd.xlane.f32.xlu0 %v862
    %v894 = vpop.xlane.xlu0 %893
    %895 = vadd.xlane.f32.xlu0 %v864
    %v896 = vpop.xlane.xlu0 %895
    %897 = vadd.xlane.f32.xlu0 %v866
    %v898 = vpop.xlane.xlu0 %897
    %899 = vadd.xlane.f32.xlu0 %v868
    %v900 = vpop.xlane.xlu0 %899
    %901 = vadd.xlane.f32.xlu0 %v870
    %v902 = vpop.xlane.xlu0 %901
    %903 = vadd.xlane.f32.xlu0 %v872
    %v904 = vpop.xlane.xlu0 %903
    %905 = vadd.xlane.f32.xlu0 %v874
    %v906 = vpop.xlane.xlu0 %905
    %907 = vadd.xlane.f32.xlu0 %v876
    %v908 = vpop.xlane.xlu0 %907
    %v909 = vlog2.pop %v878
    %v910 = vmul.f32 %v909, 0.6931472
    %v911 = vlog2.pop %v880
    %v912 = vmul.f32 %v911, 0.6931472
    %v913 = vlog2.pop %v882
    %v914 = vmul.f32 %v913, 0.6931472
    %v915 = vlog2.pop %v884
    %v916 = vmul.f32 %v915, 0.6931472
    %v917 = vlog2.pop %v886
    %v918 = vmul.f32 %v917, 0.6931472
    %v919 = vlog2.pop %v888
    %v920 = vmul.f32 %v919, 0.6931472
    %v921 = vlog2.pop %v890
    %v922 = vmul.f32 %v921, 0.6931472
    %v923 = vlog2.pop %v892
    %v924 = vmul.f32 %v923, 0.6931472
    %v925 = vlog2.pop %v894
    %v926 = vmul.f32 %v925, 0.6931472
    %v927 = vlog2.pop %v896
    %v928 = vmul.f32 %v927, 0.6931472
    %v929 = vlog2.pop %v898
    %v930 = vmul.f32 %v929, 0.6931472
    %v931 = vlog2.pop %v900
    %v932 = vmul.f32 %v931, 0.6931472
    %v933 = vlog2.pop %v902
    %v934 = vmul.f32 %v933, 0.6931472
    %v935 = vlog2.pop %v904
    %v936 = vmul.f32 %v935, 0.6931472
    %v937 = vlog2.pop %v906
    %v938 = vmul.f32 %v937, 0.6931472
    %v939 = vlog2.pop %v908
    %v940 = vmul.f32 %v939, 0.6931472
    %v941 = vsub.f32 %v829, %v910
    %v942 = vsub.f32 %v830, %v912
    %v943 = vsub.f32 %v831, %v914
    %v944 = vsub.f32 %v832, %v916
    %v945 = vsub.f32 %v833, %v918
    %v946 = vsub.f32 %v834, %v920
    %v947 = vsub.f32 %v835, %v922
    %v948 = vsub.f32 %v836, %v924
    %v949 = vsub.f32 %v837, %v926
    %v950 = vsub.f32 %v838, %v928
    %v951 = vsub.f32 %v839, %v930
    %v952 = vsub.f32 %v840, %v932
    %v953 = vsub.f32 %v841, %v934
    %v954 = vsub.f32 %v842, %v936
    %v955 = vsub.f32 %v843, %v938
    %v956 = vsub.f32 %v844, %v940
    %957 = vst [vmem:[#allocation10] sm:$0xff] %v941
    %958 = vst [vmem:[#allocation10 + $0x8] sm:$0xff] %v942
    %959 = vst [vmem:[#allocation10 + $0x10] sm:$0xff] %v943
    %960 = vst [vmem:[#allocation10 + $0x18] sm:$0xff] %v944
    %961 = vst [vmem:[#allocation10 + $0x20] sm:$0xff] %v945
    %962 = vst [vmem:[#allocation10 + $0x28] sm:$0xff] %v946
    %963 = vst [vmem:[#allocation10 + $0x30] sm:$0xff] %v947
    %964 = vst [vmem:[#allocation10 + $0x38] sm:$0xff] %v948
    %965 = vst [vmem:[#allocation10 + $0x40] sm:$0xff] %v949
    %966 = vst [vmem:[#allocation10 + $0x48] sm:$0xff] %v950
    %967 = vst [vmem:[#allocation10 + $0x50] sm:$0xff] %v951
    %968 = vst [vmem:[#allocation10 + $0x58] sm:$0xff] %v952
    %969 = vst [vmem:[#allocation10 + $0x60] sm:$0xff] %v953
    %970 = vst [vmem:[#allocation10 + $0x68] sm:$0xff] %v954
    %971 = vst [vmem:[#allocation10 + $0x70] sm:$0xff] %v955
    %972 = vst [vmem:[#allocation10 + $0x78] sm:$0xff] %v956
    // Predicated region
    $region42: #{tpu_custom_call.1} parent=1 // pred_check
      _
    $region43: #{tpu_custom_call.1} parent=1 // pred_check_branch
      %974 = sbr.rel (0) target = $region45
    $region44: #{tpu_custom_call.1} parent=1 // pred_region
      %s976 = ssub.s32 2048, 2048
      %977 = vsyncadd [#allocation4], %s976
      %s978 = sshll.u32 [#allocation10], 4
      %s979 = int_to_ptr.vmem [resolvable:$true] %s978
      %984 = dma.vmem_to_hbm [thread:$0]  %s979, 2048, %s6, [#allocation4], 128, 128, 8
    $region45: #{tpu_custom_call.1} parent=1 // pred_fallthru
      _
    // Predicated region
    $region46: #{tpu_custom_call.1} parent=1 // pred_check
      _
    $region47: #{tpu_custom_call.1} parent=1 // pred_check_branch
      %986 = sbr.rel (0) target = $region49
    $region48: #{tpu_custom_call.1} parent=1 // pred_region
      %987 = dma.done [#allocation4], 2048
    $region49: #{tpu_custom_call.1} parent=1 // pred_fallthru
      _
    %988 = vsyncpa [#allocation3], 1
    %989 = vsyncpa [#allocation6], 1
    %990 = vsyncpa [#allocation9], 1
    %991 = vsyncpa [#allocation4], 1

</llo_original>
